<compile_context>
chip_gen: v7x
topology: tpu7x:2x2x1
jax: 0.10.0
libtpu: 0.0.40
codegen_flags: <defaults>
</compile_context>

<pallas_src>
import functools

import jax
import jax.numpy as jnp
from jax import lax
from jax.experimental import pallas as pl
from jax.experimental.pallas import tpu as pltpu


def _fused_cnn_kernel(*refs, layer_cfg):
    """refs = (x_ref, w0, b0, w1, b1, ..., o_ref).

    x_ref: (B, C_in, L_in)   PyTorch NCW, whole batch resident in VMEM.
    w_i:   (C_out_i, K_i*C_in_i)  pre-laid-out im2col weight.
    b_i:   (C_out_i, 1)
    o_ref: (B, C_out_last, L_out_last)
    layer_cfg: tuple of (kernel_size, stride, padding, relu) per layer.
    """
    x_ref, o_ref = refs[0], refs[-1]
    wb_refs = refs[1:-1]

    y = x_ref[...].astype(jnp.float32)                        # (B, C_in, L_in)

    for li, (k, stride, padding, relu) in enumerate(layer_cfg):
        w = wb_refs[2 * li][...].astype(jnp.float32)          # (C_out, K*C_in)
        bias = wb_refs[2 * li + 1][...].astype(jnp.float32)   # (C_out, 1)

        b_sz, c_in, l_in = y.shape
        c_out, kc = w.shape

        if padding:
            zeros = jnp.zeros((b_sz, c_in, padding), jnp.float32)
            y = jnp.concatenate([zeros, y, zeros], axis=2)
            l_in = l_in + 2 * padding
        l_out = (l_in - k) // stride + 1

        # im2col: stack the K shifted views along the channel (sublane) axis.
        cols = []
        for kk in range(k):
            if stride == 1:
                cols.append(lax.slice(y, (0, 0, kk), (b_sz, c_in, kk + l_out)))
            else:
                # TODO(synk): strided lane slice is correct but materializes an
                # XLU shuffle; not exercised by this config (all strides == 1).
                cols.append(
                    lax.slice(y, (0, 0, kk),
                              (b_sz, c_in, kk + stride * (l_out - 1) + 1),
                              (1, 1, stride)))
        xcat = jnp.concatenate(cols, axis=1)                  # (B, K*C_in, L_out)

        # One MXU matmul per layer (batched over B), contraction dim K*C_in,
        # output lanes = L_out.
        wb = jnp.broadcast_to(w[None], (b_sz, c_out, kc))
        out = jnp.einsum('bok,bkl->bol', wb, xcat,
                         preferred_element_type=jnp.float32)  # (B, C_out, L_out)
        out = out + bias[None, :, :]
        if relu:
            out = jnp.maximum(out, 0.0)
        y = out

    o_ref[...] = y.astype(o_ref.dtype)


def fused_cnn_forward(x_ncw, flat_params, layer_cfg, out_shape):
    """x_ncw: (B, C_in, L) PyTorch NCW. flat_params: [w0, b0, w1, b1, ...]."""
    kernel = functools.partial(_fused_cnn_kernel, layer_cfg=tuple(layer_cfg))
    vmem = pl.BlockSpec(memory_space=pltpu.MemorySpace.VMEM)
    n_in = 1 + len(flat_params)
    # TODO(synk): for realistic (B, L) this whole-batch single block should be
    # tiled over B (and L) with a grid sized for the per-generation VMEM budget
    # (64 MiB on v7x); unnecessary at these shapes.
    return pl.pallas_call(
        kernel,
        out_shape=jax.ShapeDtypeStruct(out_shape, x_ncw.dtype),
        in_specs=[vmem] * n_in,
        out_specs=vmem,
    )(x_ncw, *flat_params)


class CNNEncoderPallas:
    """Pallas re-implementation of CNNEncoder forward (Conv1d + ReLU stack)."""

    def __init__(self, input_channels, hidden_channels, output_channels,
                 kernel_sizes, strides, paddings=0, activations=None, *, key):
        channels = [input_channels] + list(hidden_channels) + [output_channels]
        n = len(channels) - 1
        if not isinstance(paddings, (list, tuple)):
            paddings = [paddings] * n
        if activations is None or isinstance(activations, str):
            activations = [activations] * n
        assert n == len(kernel_sizes) == len(strides) == len(paddings) == len(activations)

        self.params = []             # PyTorch Conv1d layout: w (C_out, C_in, K), b (C_out,)
        self.flat_kernel_params = [] # pre-laid-out im2col weights / (C_out,1) biases
        self.cfg = []                # dicts, used by the pure-JAX reference
        self.layer_cfg = []          # (K, stride, padding, relu) tuples for the kernel
        keys = jax.random.split(key, 2 * n)
        for i in range(n):
            c_in, c_out, k = channels[i], channels[i + 1], kernel_sizes[i]
            fan_in = c_in * k
            bound = 1.0 / (fan_in ** 0.5)      # nn.Conv1d default init range
            w = jax.random.uniform(keys[2 * i], (c_out, c_in, k), jnp.float32, -bound, bound)
            bias = jax.random.uniform(keys[2 * i + 1], (c_out,), jnp.float32, -bound, bound)
            relu = activations[i] == 'relu'
            self.params.append((w, bias))
            self.cfg.append(dict(stride=strides[i], padding=paddings[i], relu=relu))
            self.layer_cfg.append((k, strides[i], paddings[i], relu))
            # Hoisted layout work (done once, not per forward):
            # W_cat[o, kk*C_in + ci] = w[o, ci, kk]  ->  (C_out, K*C_in)
            w_im2col = jnp.transpose(w, (0, 2, 1)).reshape(c_out, k * c_in)
            self.flat_kernel_params += [w_im2col, bias.reshape(c_out, 1)]
        # TODO(synk): embedding / normalization / pooling branches of the module
        # are not exercised by this config; dropout at eval time is the identity.

    def _out_shape(self, B, L):
        l = L
        for (k, stride, pad, _) in self.layer_cfg:
            l = (l + 2 * pad - k) // stride + 1
        c_out = self.params[-1][0].shape[0]
        return (B, c_out, l)

    def __call__(self, x_ncw):
        B, _, L = x_ncw.shape
        return fused_cnn_forward(x_ncw, self.flat_kernel_params,
                                 self.layer_cfg, self._out_shape(B, L))


def _reference_forward(x_ncw, params, cfg):
    """Pure-JAX reference (equivalent to the PyTorch nn.Sequential of Conv1d+ReLU)."""
    y = x_ncw
    for (w, b), c in zip(params, cfg):
        y = lax.conv_general_dilated(
            y, w, window_strides=(c['stride'],),
            padding=[(c['padding'], c['padding'])],
            dimension_numbers=('NCH', 'OIH', 'NCH'))
        y = y + b[None, :, None]
        if c['relu']:
            y = jnp.maximum(y, 0.0)
    return y


if __name__ == "__main__":
    key = jax.random.PRNGKey(0)
    k_x, k_p = jax.random.split(key)

    B, C_in, L = 2, 4, 16
    x = jax.random.normal(k_x, (B, C_in, L), jnp.float32)   # PyTorch NCW

    enc = CNNEncoderPallas(
        input_channels=C_in,
        hidden_channels=[8, 16],
        output_channels=32,
        kernel_sizes=[3, 3, 3],
        strides=[1, 1, 1],
        paddings=0,
        activations='relu',
        key=k_p,
    )

    out = enc(x)
    out = jax.block_until_ready(out)

    ref = _reference_forward(x, enc.params, enc.cfg)
    assert out.shape == ref.shape == (B, 32, L - 3 * (3 - 1)), (out.shape, ref.shape)
    assert jnp.allclose(out, ref, atol=1e-4, rtol=1e-4), "mismatch vs JAX reference"

    print("KERNEL_OK")
</pallas_src>

<mosaic_0001>
module attributes {stable_mosaic.version = 11 : i64} {
  func.func @_fused_cnn_kernel(%arg0: memref<2x4x16xf32, #tpu.memory_space<vmem>>, %arg1: memref<8x12xf32, #tpu.memory_space<vmem>>, %arg2: memref<8x1xf32, #tpu.memory_space<vmem>>, %arg3: memref<16x24xf32, #tpu.memory_space<vmem>>, %arg4: memref<16x1xf32, #tpu.memory_space<vmem>>, %arg5: memref<32x48xf32, #tpu.memory_space<vmem>>, %arg6: memref<32x1xf32, #tpu.memory_space<vmem>>, %arg7: memref<2x32x10xf32, #tpu.memory_space<vmem>>) attributes {dimension_semantics = [], scalar_prefetch = 0 : i64, scratch_operands = 0 : i64, tpu.core_type = #tpu.core_type<tc>} {
    %c0 = arith.constant 0 : index
    %c0_0 = arith.constant 0 : index
    %c0_1 = arith.constant 0 : index
    %0 = vector.load %arg0[%c0, %c0_0, %c0_1] : memref<2x4x16xf32, #tpu.memory_space<vmem>>, vector<2x4x16xf32>
    %c0_2 = arith.constant 0 : index
    %c0_3 = arith.constant 0 : index
    %1 = vector.load %arg1[%c0_2, %c0_3] : memref<8x12xf32, #tpu.memory_space<vmem>>, vector<8x12xf32>
    %c0_4 = arith.constant 0 : index
    %c0_5 = arith.constant 0 : index
    %2 = vector.load %arg2[%c0_4, %c0_5] : memref<8x1xf32, #tpu.memory_space<vmem>>, vector<8x1xf32>
    %3 = vector.extract_strided_slice %0 {offsets = [0, 0, 0], sizes = [2, 4, 14], strides = [1, 1, 1]} : vector<2x4x16xf32> to vector<2x4x14xf32>
    %4 = vector.extract_strided_slice %0 {offsets = [0, 0, 1], sizes = [2, 4, 14], strides = [1, 1, 1]} : vector<2x4x16xf32> to vector<2x4x14xf32>
    %5 = vector.extract_strided_slice %0 {offsets = [0, 0, 2], sizes = [2, 4, 14], strides = [1, 1, 1]} : vector<2x4x16xf32> to vector<2x4x14xf32>
    %6 = tpu.concatenate %3, %4, %5 in 1 : vector<2x4x14xf32>, vector<2x4x14xf32>, vector<2x4x14xf32> -> vector<2x12x14xf32>
    %7 = vector.shape_cast %1 : vector<8x12xf32> to vector<1x8x12xf32>
    %8 = vector.shape_cast %7 : vector<1x8x12xf32> to vector<1x8x12xf32>
    %9 = vector.broadcast %8 : vector<1x8x12xf32> to vector<2x8x12xf32>
    "tpu.trace_start"() <{level = 10 : i32, message = "bok,bkl->bol"}> : () -> ()
    %cst = arith.constant dense<0.000000e+00> : vector<2x8x14xf32>
    %10 = tpu.matmul %9, %6, %cst {dimension_numbers = #tpu.dot_dimension_numbers<[2], [1], [1], [2], [0, 0, 0, 1, 1, 2], [0], [0]>} : vector<2x8x12xf32>, vector<2x12x14xf32>, vector<2x8x14xf32> -> vector<2x8x14xf32>
    "tpu.trace_stop"() : () -> ()
    %11 = vector.shape_cast %2 : vector<8x1xf32> to vector<1x8x1xf32>
    %12 = vector.broadcast %11 : vector<1x8x1xf32> to vector<2x8x14xf32>
    %13 = arith.addf %10, %12 : vector<2x8x14xf32>
    %cst_6 = arith.constant 0.000000e+00 : f32
    %14 = vector.broadcast %cst_6 : f32 to vector<2x8x14xf32>
    %15 = arith.maximumf %13, %14 : vector<2x8x14xf32>
    %c0_7 = arith.constant 0 : index
    %c0_8 = arith.constant 0 : index
    %16 = vector.load %arg3[%c0_7, %c0_8] : memref<16x24xf32, #tpu.memory_space<vmem>>, vector<16x24xf32>
    %c0_9 = arith.constant 0 : index
    %c0_10 = arith.constant 0 : index
    %17 = vector.load %arg4[%c0_9, %c0_10] : memref<16x1xf32, #tpu.memory_space<vmem>>, vector<16x1xf32>
    %18 = vector.extract_strided_slice %15 {offsets = [0, 0, 0], sizes = [2, 8, 12], strides = [1, 1, 1]} : vector<2x8x14xf32> to vector<2x8x12xf32>
    %19 = vector.extract_strided_slice %15 {offsets = [0, 0, 1], sizes = [2, 8, 12], strides = [1, 1, 1]} : vector<2x8x14xf32> to vector<2x8x12xf32>
    %20 = vector.extract_strided_slice %15 {offsets = [0, 0, 2], sizes = [2, 8, 12], strides = [1, 1, 1]} : vector<2x8x14xf32> to vector<2x8x12xf32>
    %21 = tpu.concatenate %18, %19, %20 in 1 : vector<2x8x12xf32>, vector<2x8x12xf32>, vector<2x8x12xf32> -> vector<2x24x12xf32>
    %22 = vector.shape_cast %16 : vector<16x24xf32> to vector<1x16x24xf32>
    %23 = vector.shape_cast %22 : vector<1x16x24xf32> to vector<1x16x24xf32>
    %24 = vector.broadcast %23 : vector<1x16x24xf32> to vector<2x16x24xf32>
    "tpu.trace_start"() <{level = 10 : i32, message = "bok,bkl->bol"}> : () -> ()
    %cst_11 = arith.constant dense<0.000000e+00> : vector<2x16x12xf32>
    %25 = tpu.matmul %24, %21, %cst_11 {dimension_numbers = #tpu.dot_dimension_numbers<[2], [1], [1], [2], [0, 0, 0, 1, 1, 2], [0], [0]>} : vector<2x16x24xf32>, vector<2x24x12xf32>, vector<2x16x12xf32> -> vector<2x16x12xf32>
    "tpu.trace_stop"() : () -> ()
    %26 = vector.shape_cast %17 : vector<16x1xf32> to vector<1x16x1xf32>
    %27 = vector.broadcast %26 : vector<1x16x1xf32> to vector<2x16x12xf32>
    %28 = arith.addf %25, %27 : vector<2x16x12xf32>
    %cst_12 = arith.constant 0.000000e+00 : f32
    %29 = vector.broadcast %cst_12 : f32 to vector<2x16x12xf32>
    %30 = arith.maximumf %28, %29 : vector<2x16x12xf32>
    %c0_13 = arith.constant 0 : index
    %c0_14 = arith.constant 0 : index
    %31 = vector.load %arg5[%c0_13, %c0_14] : memref<32x48xf32, #tpu.memory_space<vmem>>, vector<32x48xf32>
    %c0_15 = arith.constant 0 : index
    %c0_16 = arith.constant 0 : index
    %32 = vector.load %arg6[%c0_15, %c0_16] : memref<32x1xf32, #tpu.memory_space<vmem>>, vector<32x1xf32>
    %33 = vector.extract_strided_slice %30 {offsets = [0, 0, 0], sizes = [2, 16, 10], strides = [1, 1, 1]} : vector<2x16x12xf32> to vector<2x16x10xf32>
    %34 = vector.extract_strided_slice %30 {offsets = [0, 0, 1], sizes = [2, 16, 10], strides = [1, 1, 1]} : vector<2x16x12xf32> to vector<2x16x10xf32>
    %35 = vector.extract_strided_slice %30 {offsets = [0, 0, 2], sizes = [2, 16, 10], strides = [1, 1, 1]} : vector<2x16x12xf32> to vector<2x16x10xf32>
    %36 = tpu.concatenate %33, %34, %35 in 1 : vector<2x16x10xf32>, vector<2x16x10xf32>, vector<2x16x10xf32> -> vector<2x48x10xf32>
    %37 = vector.shape_cast %31 : vector<32x48xf32> to vector<1x32x48xf32>
    %38 = vector.shape_cast %37 : vector<1x32x48xf32> to vector<1x32x48xf32>
    %39 = vector.broadcast %38 : vector<1x32x48xf32> to vector<2x32x48xf32>
    "tpu.trace_start"() <{level = 10 : i32, message = "bok,bkl->bol"}> : () -> ()
    %cst_17 = arith.constant dense<0.000000e+00> : vector<2x32x10xf32>
    %40 = tpu.matmul %39, %36, %cst_17 {dimension_numbers = #tpu.dot_dimension_numbers<[2], [1], [1], [2], [0, 0, 0, 1, 1, 2], [0], [0]>} : vector<2x32x48xf32>, vector<2x48x10xf32>, vector<2x32x10xf32> -> vector<2x32x10xf32>
    "tpu.trace_stop"() : () -> ()
    %41 = vector.shape_cast %32 : vector<32x1xf32> to vector<1x32x1xf32>
    %42 = vector.broadcast %41 : vector<1x32x1xf32> to vector<2x32x10xf32>
    %43 = arith.addf %40, %42 : vector<2x32x10xf32>
    %cst_18 = arith.constant 0.000000e+00 : f32
    %44 = vector.broadcast %cst_18 : f32 to vector<2x32x10xf32>
    %45 = arith.maximumf %43, %44 : vector<2x32x10xf32>
    %c0_19 = arith.constant 0 : index
    %c0_20 = arith.constant 0 : index
    %c0_21 = arith.constant 0 : index
    %46 = vector.load %arg7[%c0_19, %c0_20, %c0_21] : memref<2x32x10xf32, #tpu.memory_space<vmem>>, vector<2x32x10xf32>
    tpu.vector_store %arg7[%c0_19, %c0_20, %c0_21], %45 {strides = array<i32>} : memref<2x32x10xf32, #tpu.memory_space<vmem>>, vector<2x32x10xf32>,
    return
  }
}

</mosaic_0001>

<llo_original>
// kernel: tpu_custom_call.1
$region0: #{tpu_custom_call.1}
  #allocation0 [shape = 'u32[]', space=smem, size = 0x4, offset = 0x4, fixed_abs, tag = 'smem constant byte address 0x4 - core index']
  #allocation1 [shape = 'u32[144,128]{1,0:T(1,128)}', space=vmem, size = 0x12000, scoped, tag = 'internal scratch']
  %s0 = inlined_call_operand.vmem [shape: f32[2,4,16], index: 0, kind: input, shape index: {}]
  %s1 = inlined_call_operand.hbm [shape: f32[8,12], index: 1, kind: input, shape index: {}]
  %s2 = inlined_call_operand.vmem [shape: f32[8,1], index: 2, kind: input, shape index: {}]
  %s3 = inlined_call_operand.vmem [shape: f32[16,24], index: 3, kind: input, shape index: {}]
  %s4 = inlined_call_operand.vmem [shape: f32[16,1], index: 4, kind: input, shape index: {}]
  %s5 = inlined_call_operand.vmem [shape: f32[32,48], index: 5, kind: input, shape index: {}]
  %s6 = inlined_call_operand.vmem [shape: f32[32,1], index: 6, kind: input, shape index: {}]
  %s7 = inlined_call_operand.vmem [shape: f32[2,32,10], index: 7, kind: output, shape index: {}]
  %s8 = sld [smem:[#allocation0]]
  $region42: #{tpu_custom_call.1} parent=0
    _
  %s10 = ssub.s32 1, %s8
  %s11 = scalar_select 0, %s10, %s8
  $region1: #{tpu_custom_call.1} parent=0
    #allocation2 [shape = 'u8[4096]{0}', space=vmem, size = 0x1000, scoped, tag = 'input window, operand 1, single buffered']
    #allocation3 [shape = 's32[1]{0}', space=sflag, size = 0x4, scoped, tag = 'scoped memory for tpu_custom_call.1']
    %12 = vsyncpa [#allocation3], 0
    // Predicated region
    $region2: #{tpu_custom_call.1} parent=1 // pred_check
      _
    $region3: #{tpu_custom_call.1} parent=1 // pred_check_branch
      %14 = sbr.rel (0) target = $region5
    $region4: #{tpu_custom_call.1} parent=1 // pred_region
      _
    $region5: #{tpu_custom_call.1} parent=1 // pred_fallthru
      _
    // Predicated region
    $region6: #{tpu_custom_call.1} parent=1 // pred_check
      _
    $region7: #{tpu_custom_call.1} parent=1 // pred_check_branch
      %16 = sbr.rel (0) target = $region9
    $region8: #{tpu_custom_call.1} parent=1 // pred_region
      %s18 = ssub.s32 128, 128
      %19 = vsyncadd [#allocation3], %s18
      %s21 = sshll.u32 [#allocation2], 4
      %s22 = int_to_ptr.vmem [resolvable:$true] %s21
      %24 = dma.hbm_to_vmem [thread:$0]  %s1, 128, %s22, [#allocation3]
    $region9: #{tpu_custom_call.1} parent=1 // pred_fallthru
      _
    // Predicated region
    $region10: #{tpu_custom_call.1} parent=1 // pred_check
      _
    $region11: #{tpu_custom_call.1} parent=1 // pred_check_branch
      %26 = sbr.rel (0) target = $region13
    $region12: #{tpu_custom_call.1} parent=1 // pred_region
      _
    $region13: #{tpu_custom_call.1} parent=1 // pred_fallthru
      _
    // Predicated region
    $region14: #{tpu_custom_call.1} parent=1 // pred_check
      _
    $region15: #{tpu_custom_call.1} parent=1 // pred_check_branch
      %28 = sbr.rel (0) target = $region17
    $region16: #{tpu_custom_call.1} parent=1 // pred_region
      _
    $region17: #{tpu_custom_call.1} parent=1 // pred_fallthru
      _
    // Predicated region
    $region18: #{tpu_custom_call.1} parent=1 // pred_check
      _
    $region19: #{tpu_custom_call.1} parent=1 // pred_check_branch
      %30 = sbr.rel (0) target = $region21
    $region20: #{tpu_custom_call.1} parent=1 // pred_region
      _
    $region21: #{tpu_custom_call.1} parent=1 // pred_fallthru
      _
    // Predicated region
    $region22: #{tpu_custom_call.1} parent=1 // pred_check
      _
    $region23: #{tpu_custom_call.1} parent=1 // pred_check_branch
      %32 = sbr.rel (0) target = $region25
    $region24: #{tpu_custom_call.1} parent=1 // pred_region
      _
    $region25: #{tpu_custom_call.1} parent=1 // pred_fallthru
      _
    // Predicated region
    $region26: #{tpu_custom_call.1} parent=1 // pred_check
      _
    $region27: #{tpu_custom_call.1} parent=1 // pred_check_branch
      %34 = sbr.rel (0) target = $region29
    $region28: #{tpu_custom_call.1} parent=1 // pred_region
      _
    $region29: #{tpu_custom_call.1} parent=1 // pred_fallthru
      _
    // Predicated region
    $region30: #{tpu_custom_call.1} parent=1 // pred_check
      _
    $region31: #{tpu_custom_call.1} parent=1 // pred_check_branch
      %36 = sbr.rel (0) target = $region33
    $region32: #{tpu_custom_call.1} parent=1 // pred_region
      %37 = dma.done [#allocation3], 128
    $region33: #{tpu_custom_call.1} parent=1 // pred_fallthru
      _
    %v38 = vld [vmem:[%s0] sm:$0xf]
    %v39 = vld [vmem:[%s0 + $0x4] sm:$0xf]
    %v40 = vld [vmem:[#allocation2] sm:$0xff]
    %v41 = vld [vmem:[%s2] sm:$0xff]
    %v44 = vrot.slane %v38, 4
    %v45 = vrot.slane %v39, 4
    %46 = vrot.lane.b32.xlu0 %v44, 127
    %v47 = vpop.permute.xlu0 %46
    %48 = vrot.lane.b32.xlu0 %v45, 127
    %v49 = vpop.permute.xlu0 %48
    %52 = vrot.lane.b32.xlu0 %v38, 126
    %v53 = vpop.permute.xlu0 %52
    %54 = vrot.lane.b32.xlu0 %v39, 126
    %v55 = vpop.permute.xlu0 %54
    %vm56 = vcmask 1043456
    %v57 = vsel %vm56, %v38, %v47
    %v58 = vsel %vm56, %v39, %v49
    %60 = vset.pattern.permute.xlu0 0
    %61 = vperm.xlu0 %60, %v41
    %v62 = vpop.permute.xlu0 %61
    %vm64 = vcmask 97280
    %v66 = vsel %vm64, %v40, 0
    %v68 = vsel %vm56, %v53, 0
    %70 = vmatprep.subr.mxu0 0.0
    %71 = vmatpush1.msra.mxu0 %v57
    %72 = vmatprep.subr.mxu0 0.0
    %73 = vmatpush1.msra.mxu0 %v68
    %74 = vmatprep.subr.mxu0 0.0
    %75 = vmatpush1.msra.mxu0 0.0
    %76 = vmatprep.subr.mxu0 0.0
    %77 = vmatpush1.msra.mxu0 0.0
    %78 = vmatprep.subr.mxu0 0.0
    %79 = vmatpush1.msra.mxu0 0.0
    %80 = vmatprep.subr.mxu0 0.0
    %81 = vmatpush1.msra.mxu0 0.0
    %82 = vmatprep.subr.mxu0 0.0
    %83 = vmatpush1.msra.mxu0 0.0
    %84 = vmatprep.subr.mxu0 0.0
    %85 = vmatpush1.msra.mxu0 0.0
    %86 = vmatprep.subr.mxu0 0.0
    %87 = vmatpush1.msra.mxu0 0.0
    %88 = vmatprep.subr.mxu0 0.0
    %89 = vmatpush1.msra.mxu0 0.0
    %90 = vmatprep.subr.mxu0 0.0
    %91 = vmatpush1.msra.mxu0 0.0
    %92 = vmatprep.subr.mxu0 0.0
    %93 = vmatpush1.msra.mxu0 0.0
    %94 = vmatprep.subr.mxu0 0.0
    %95 = vmatpush1.msra.mxu0 0.0
    %96 = vmatprep.subr.mxu0 0.0
    %97 = vmatpush1.msra.mxu0 0.0
    %98 = vmatprep.subr.mxu0 0.0
    %99 = vmatpush1.msra.mxu0 0.0
    %100 = vmatprep.subr.mxu0 0.0
    %101 = vmatpush1.msra.mxu0 0.0
    %102 = vmatprep.subr.mxu0 0.0
    %103 = vmatpush1.msra.mxu0 0.0
    %104 = vmatprep.subr.mxu0 0.0
    %105 = vmatpush1.msra.mxu0 0.0
    %106 = vmatprep.subr.mxu0 0.0
    %107 = vmatpush1.msra.mxu0 0.0
    %108 = vmatprep.subr.mxu0 0.0
    %109 = vmatpush1.msra.mxu0 0.0
    %110 = vmatprep.subr.mxu0 0.0
    %111 = vmatpush1.msra.mxu0 0.0
    %112 = vmatprep.subr.mxu0 0.0
    %113 = vmatpush1.msra.mxu0 0.0
    %114 = vmatprep.subr.mxu0 0.0
    %115 = vmatpush1.msra.mxu0 0.0
    %116 = vmatprep.subr.mxu0 0.0
    %117 = vmatpush1.msra.mxu0 0.0
    %118 = vmatprep.subr.mxu0 0.0
    %119 = vmatpush1.msra.mxu0 0.0
    %120 = vmatprep.subr.mxu0 0.0
    %121 = vmatpush1.msra.mxu0 0.0
    %122 = vmatprep.subr.mxu0 0.0
    %123 = vmatpush1.msra.mxu0 0.0
    %124 = vmatprep.subr.mxu0 0.0
    %125 = vmatpush1.msra.mxu0 0.0
    %126 = vmatprep.subr.mxu0 0.0
    %127 = vmatpush1.msra.mxu0 0.0
    %128 = vmatprep.subr.mxu0 0.0
    %129 = vmatpush1.msra.mxu0 0.0
    %130 = vmatprep.subr.mxu0 0.0
    %131 = vmatpush1.msra.mxu0 0.0
    %132 = vmatprep.subr.mxu0 0.0
    %133 = vmatpush1.msra.mxu0 0.0
    %134 = vmatprep.mubr.f32.mxu0 0.0
    %135 = vmatmul.mubr.f32.gmra.mrb[0].mxu0 %v66
    %v136 = vpop.f32.mrb[0].mxu0
    %v137 = vadd.f32 %v62, %v136
    %v138 = vpop.f32.mrb[0].mxu0
    %139 = vdwg.mxu0
    %v140 = vsel %vm56, %v55, 0
    %142 = vmatprep.subr.mxu0 0.0
    %143 = vmatpush1.msra.mxu0 %v58
    %144 = vmatprep.subr.mxu0 0.0
    %145 = vmatpush1.msra.mxu0 %v140
    %146 = vmatprep.subr.mxu0 0.0
    %147 = vmatpush1.msra.mxu0 0.0
    %148 = vmatprep.subr.mxu0 0.0
    %149 = vmatpush1.msra.mxu0 0.0
    %150 = vmatprep.subr.mxu0 0.0
    %151 = vmatpush1.msra.mxu0 0.0
    %152 = vmatprep.subr.mxu0 0.0
    %153 = vmatpush1.msra.mxu0 0.0
    %154 = vmatprep.subr.mxu0 0.0
    %155 = vmatpush1.msra.mxu0 0.0
    %156 = vmatprep.subr.mxu0 0.0
    %157 = vmatpush1.msra.mxu0 0.0
    %158 = vmatprep.subr.mxu0 0.0
    %159 = vmatpush1.msra.mxu0 0.0
    %160 = vmatprep.subr.mxu0 0.0
    %161 = vmatpush1.msra.mxu0 0.0
    %162 = vmatprep.subr.mxu0 0.0
    %163 = vmatpush1.msra.mxu0 0.0
    %164 = vmatprep.subr.mxu0 0.0
    %165 = vmatpush1.msra.mxu0 0.0
    %166 = vmatprep.subr.mxu0 0.0
    %167 = vmatpush1.msra.mxu0 0.0
    %168 = vmatprep.subr.mxu0 0.0
    %169 = vmatpush1.msra.mxu0 0.0
    %170 = vmatprep.subr.mxu0 0.0
    %171 = vmatpush1.msra.mxu0 0.0
    %172 = vmatprep.subr.mxu0 0.0
    %173 = vmatpush1.msra.mxu0 0.0
    %174 = vmatprep.subr.mxu0 0.0
    %175 = vmatpush1.msra.mxu0 0.0
    %176 = vmatprep.subr.mxu0 0.0
    %177 = vmatpush1.msra.mxu0 0.0
    %178 = vmatprep.subr.mxu0 0.0
    %179 = vmatpush1.msra.mxu0 0.0
    %180 = vmatprep.subr.mxu0 0.0
    %181 = vmatpush1.msra.mxu0 0.0
    %182 = vmatprep.subr.mxu0 0.0
    %183 = vmatpush1.msra.mxu0 0.0
    %184 = vmatprep.subr.mxu0 0.0
    %185 = vmatpush1.msra.mxu0 0.0
    %186 = vmatprep.subr.mxu0 0.0
    %187 = vmatpush1.msra.mxu0 0.0
    %188 = vmatprep.subr.mxu0 0.0
    %189 = vmatpush1.msra.mxu0 0.0
    %190 = vmatprep.subr.mxu0 0.0
    %191 = vmatpush1.msra.mxu0 0.0
    %192 = vmatprep.subr.mxu0 0.0
    %193 = vmatpush1.msra.mxu0 0.0
    %194 = vmatprep.subr.mxu0 0.0
    %195 = vmatpush1.msra.mxu0 0.0
    %196 = vmatprep.subr.mxu0 0.0
    %197 = vmatpush1.msra.mxu0 0.0
    %198 = vmatprep.subr.mxu0 0.0
    %199 = vmatpush1.msra.mxu0 0.0
    %200 = vmatprep.subr.mxu0 0.0
    %201 = vmatpush1.msra.mxu0 0.0
    %202 = vmatprep.subr.mxu0 0.0
    %203 = vmatpush1.msra.mxu0 0.0
    %204 = vmatprep.subr.mxu0 0.0
    %205 = vmatpush1.msra.mxu0 0.0
    %206 = vmatprep.mubr.f32.mxu0 0.0
    %207 = vmatmul.mubr.f32.gmra.mrb[0].mxu0 %v66
    %v208 = vpop.f32.mrb[0].mxu0
    %v209 = vadd.f32 %v62, %v208
    %v210 = vpop.f32.mrb[0].mxu0
    %211 = vdwg.mxu0
    %v212 = vmax.f32 %v137, 0.0
    %v213 = vmax.f32 %v209, 0.0
    %v214 = vld [vmem:[%s3] sm:$0xff]
    %v215 = vld [vmem:[%s3 + $0x8] sm:$0xff]
    %v216 = vld [vmem:[%s4] sm:$0xff]
    %v217 = vld [vmem:[%s4 + $0x8] sm:$0xff]
    %220 = vrot.lane.b32.xlu0 %v212, 127
    %v221 = vpop.permute.xlu0 %220
    %222 = vrot.lane.b32.xlu0 %v213, 127
    %v223 = vpop.permute.xlu0 %222
    %226 = vrot.lane.b32.xlu0 %v212, 126
    %v227 = vpop.permute.xlu0 %226
    %228 = vrot.lane.b32.xlu0 %v213, 126
    %v229 = vpop.permute.xlu0 %228
    %233 = vset.pattern.permute.xlu0 0
    %234 = vperm.xlu0 %233, %v216
    %v235 = vpop.permute.xlu0 %234
    %238 = vset.pattern.permute.xlu0 0
    %239 = vperm.xlu0 %238, %v217
    %v240 = vpop.permute.xlu0 %239
    %vm242 = vcmask 195584
    %v244 = vsel %vm242, %v214, 0
    %v247 = vsel %vm242, %v215, 0
    %249 = vmatprep.subr.mxu0 0.0
    %250 = vmatpush1.msra.mxu0 %v212
    %251 = vmatprep.subr.mxu0 0.0
    %252 = vmatpush1.msra.mxu0 %v221
    %253 = vmatprep.subr.mxu0 0.0
    %254 = vmatpush1.msra.mxu0 %v227
    %255 = vmatprep.subr.mxu0 0.0
    %256 = vmatpush1.msra.mxu0 0.0
    %257 = vmatprep.subr.mxu0 0.0
    %258 = vmatpush1.msra.mxu0 0.0
    %259 = vmatprep.subr.mxu0 0.0
    %260 = vmatpush1.msra.mxu0 0.0
    %261 = vmatprep.subr.mxu0 0.0
    %262 = vmatpush1.msra.mxu0 0.0
    %263 = vmatprep.subr.mxu0 0.0
    %264 = vmatpush1.msra.mxu0 0.0
    %265 = vmatprep.subr.mxu0 0.0
    %266 = vmatpush1.msra.mxu0 0.0
    %267 = vmatprep.subr.mxu0 0.0
    %268 = vmatpush1.msra.mxu0 0.0
    %269 = vmatprep.subr.mxu0 0.0
    %270 = vmatpush1.msra.mxu0 0.0
    %271 = vmatprep.subr.mxu0 0.0
    %272 = vmatpush1.msra.mxu0 0.0
    %273 = vmatprep.subr.mxu0 0.0
    %274 = vmatpush1.msra.mxu0 0.0
    %275 = vmatprep.subr.mxu0 0.0
    %276 = vmatpush1.msra.mxu0 0.0
    %277 = vmatprep.subr.mxu0 0.0
    %278 = vmatpush1.msra.mxu0 0.0
    %279 = vmatprep.subr.mxu0 0.0
    %280 = vmatpush1.msra.mxu0 0.0
    %281 = vmatprep.subr.mxu0 0.0
    %282 = vmatpush1.msra.mxu0 0.0
    %283 = vmatprep.subr.mxu0 0.0
    %284 = vmatpush1.msra.mxu0 0.0
    %285 = vmatprep.subr.mxu0 0.0
    %286 = vmatpush1.msra.mxu0 0.0
    %287 = vmatprep.subr.mxu0 0.0
    %288 = vmatpush1.msra.mxu0 0.0
    %289 = vmatprep.subr.mxu0 0.0
    %290 = vmatpush1.msra.mxu0 0.0
    %291 = vmatprep.subr.mxu0 0.0
    %292 = vmatpush1.msra.mxu0 0.0
    %293 = vmatprep.subr.mxu0 0.0
    %294 = vmatpush1.msra.mxu0 0.0
    %295 = vmatprep.subr.mxu0 0.0
    %296 = vmatpush1.msra.mxu0 0.0
    %297 = vmatprep.subr.mxu0 0.0
    %298 = vmatpush1.msra.mxu0 0.0
    %299 = vmatprep.subr.mxu0 0.0
    %300 = vmatpush1.msra.mxu0 0.0
    %301 = vmatprep.subr.mxu0 0.0
    %302 = vmatpush1.msra.mxu0 0.0
    %303 = vmatprep.subr.mxu0 0.0
    %304 = vmatpush1.msra.mxu0 0.0
    %305 = vmatprep.subr.mxu0 0.0
    %306 = vmatpush1.msra.mxu0 0.0
    %307 = vmatprep.subr.mxu0 0.0
    %308 = vmatpush1.msra.mxu0 0.0
    %309 = vmatprep.subr.mxu0 0.0
    %310 = vmatpush1.msra.mxu0 0.0
    %311 = vmatprep.subr.mxu0 0.0
    %312 = vmatpush1.msra.mxu0 0.0
    %313 = vmatprep.mubr.f32.mxu0 0.0
    %314 = vmatmul.mubr.f32.gmra.mrb[0].mxu0 %v244
    %v315 = vpop.f32.mrb[0].mxu0
    %v316 = vadd.f32 %v235, %v315
    %v317 = vpop.f32.mrb[0].mxu0
    %318 = vmatprep.mubr.f32.mxu0 0.0
    %319 = vmatmul.mubr.f32.gmra.mrb[0].mxu0 %v247
    %v320 = vpop.f32.mrb[0].mxu0
    %v321 = vadd.f32 %v240, %v320
    %v322 = vpop.f32.mrb[0].mxu0
    %323 = vdwg.mxu0
    %324 = vmatprep.subr.mxu0 0.0
    %325 = vmatpush1.msra.mxu0 %v213
    %326 = vmatprep.subr.mxu0 0.0
    %327 = vmatpush1.msra.mxu0 %v223
    %328 = vmatprep.subr.mxu0 0.0
    %329 = vmatpush1.msra.mxu0 %v229
    %330 = vmatprep.subr.mxu0 0.0
    %331 = vmatpush1.msra.mxu0 0.0
    %332 = vmatprep.subr.mxu0 0.0
    %333 = vmatpush1.msra.mxu0 0.0
    %334 = vmatprep.subr.mxu0 0.0
    %335 = vmatpush1.msra.mxu0 0.0
    %336 = vmatprep.subr.mxu0 0.0
    %337 = vmatpush1.msra.mxu0 0.0
    %338 = vmatprep.subr.mxu0 0.0
    %339 = vmatpush1.msra.mxu0 0.0
    %340 = vmatprep.subr.mxu0 0.0
    %341 = vmatpush1.msra.mxu0 0.0
    %342 = vmatprep.subr.mxu0 0.0
    %343 = vmatpush1.msra.mxu0 0.0
    %344 = vmatprep.subr.mxu0 0.0
    %345 = vmatpush1.msra.mxu0 0.0
    %346 = vmatprep.subr.mxu0 0.0
    %347 = vmatpush1.msra.mxu0 0.0
    %348 = vmatprep.subr.mxu0 0.0
    %349 = vmatpush1.msra.mxu0 0.0
    %350 = vmatprep.subr.mxu0 0.0
    %351 = vmatpush1.msra.mxu0 0.0
    %352 = vmatprep.subr.mxu0 0.0
    %353 = vmatpush1.msra.mxu0 0.0
    %354 = vmatprep.subr.mxu0 0.0
    %355 = vmatpush1.msra.mxu0 0.0
    %356 = vmatprep.subr.mxu0 0.0
    %357 = vmatpush1.msra.mxu0 0.0
    %358 = vmatprep.subr.mxu0 0.0
    %359 = vmatpush1.msra.mxu0 0.0
    %360 = vmatprep.subr.mxu0 0.0
    %361 = vmatpush1.msra.mxu0 0.0
    %362 = vmatprep.subr.mxu0 0.0
    %363 = vmatpush1.msra.mxu0 0.0
    %364 = vmatprep.subr.mxu0 0.0
    %365 = vmatpush1.msra.mxu0 0.0
    %366 = vmatprep.subr.mxu0 0.0
    %367 = vmatpush1.msra.mxu0 0.0
    %368 = vmatprep.subr.mxu0 0.0
    %369 = vmatpush1.msra.mxu0 0.0
    %370 = vmatprep.subr.mxu0 0.0
    %371 = vmatpush1.msra.mxu0 0.0
    %372 = vmatprep.subr.mxu0 0.0
    %373 = vmatpush1.msra.mxu0 0.0
    %374 = vmatprep.subr.mxu0 0.0
    %375 = vmatpush1.msra.mxu0 0.0
    %376 = vmatprep.subr.mxu0 0.0
    %377 = vmatpush1.msra.mxu0 0.0
    %378 = vmatprep.subr.mxu0 0.0
    %379 = vmatpush1.msra.mxu0 0.0
    %380 = vmatprep.subr.mxu0 0.0
    %381 = vmatpush1.msra.mxu0 0.0
    %382 = vmatprep.subr.mxu0 0.0
    %383 = vmatpush1.msra.mxu0 0.0
    %384 = vmatprep.subr.mxu0 0.0
    %385 = vmatpush1.msra.mxu0 0.0
    %386 = vmatprep.subr.mxu0 0.0
    %387 = vmatpush1.msra.mxu0 0.0
    %388 = vmatprep.mubr.f32.mxu0 0.0
    %389 = vmatmul.mubr.f32.gmra.mrb[0].mxu0 %v244
    %v390 = vpop.f32.mrb[0].mxu0
    %v391 = vadd.f32 %v235, %v390
    %v392 = vpop.f32.mrb[0].mxu0
    %393 = vmatprep.mubr.f32.mxu0 0.0
    %394 = vmatmul.mubr.f32.gmra.mrb[0].mxu0 %v247
    %v395 = vpop.f32.mrb[0].mxu0
    %v396 = vadd.f32 %v240, %v395
    %v397 = vpop.f32.mrb[0].mxu0
    %398 = vdwg.mxu0
    %v399 = vmax.f32 %v316, 0.0
    %v400 = vmax.f32 %v321, 0.0
    %v401 = vmax.f32 %v391, 0.0
    %v402 = vmax.f32 %v396, 0.0
    %v403 = vld [vmem:[%s5] sm:$0xff]
    %v404 = vld [vmem:[%s5 + $0x8] sm:$0xff]
    %v405 = vld [vmem:[%s5 + $0x10] sm:$0xff]
    %v406 = vld [vmem:[%s5 + $0x18] sm:$0xff]
    %v407 = vld [vmem:[%s6] sm:$0xff]
    %v408 = vld [vmem:[%s6 + $0x8] sm:$0xff]
    %v409 = vld [vmem:[%s6 + $0x10] sm:$0xff]
    %v410 = vld [vmem:[%s6 + $0x18] sm:$0xff]
    %415 = vrot.lane.b32.xlu0 %v399, 127
    %v416 = vpop.permute.xlu0 %415
    %417 = vrot.lane.b32.xlu0 %v400, 127
    %v418 = vpop.permute.xlu0 %417
    %419 = vrot.lane.b32.xlu0 %v401, 127
    %v420 = vpop.permute.xlu0 %419
    %421 = vrot.lane.b32.xlu0 %v402, 127
    %v422 = vpop.permute.xlu0 %421
    %427 = vrot.lane.b32.xlu0 %v399, 126
    %v428 = vpop.permute.xlu0 %427
    %429 = vrot.lane.b32.xlu0 %v400, 126
    %v430 = vpop.permute.xlu0 %429
    %431 = vrot.lane.b32.xlu0 %v401, 126
    %v432 = vpop.permute.xlu0 %431
    %433 = vrot.lane.b32.xlu0 %v402, 126
    %v434 = vpop.permute.xlu0 %433
    %440 = vset.pattern.permute.xlu0 0
    %441 = vperm.xlu0 %440, %v407
    %v442 = vpop.permute.xlu0 %441
    %445 = vset.pattern.permute.xlu0 0
    %446 = vperm.xlu0 %445, %v408
    %v447 = vpop.permute.xlu0 %446
    %450 = vset.pattern.permute.xlu0 0
    %451 = vperm.xlu0 %450, %v409
    %v452 = vpop.permute.xlu0 %451
    %455 = vset.pattern.permute.xlu0 0
    %456 = vperm.xlu0 %455, %v410
    %v457 = vpop.permute.xlu0 %456
    %vm459 = vcmask 392192
    %v461 = vsel %vm459, %v403, 0
    %v464 = vsel %vm459, %v404, 0
    %v467 = vsel %vm459, %v405, 0
    %v470 = vsel %vm459, %v406, 0
    %472 = vmatprep.subr.mxu0 0.0
    %473 = vmatpush1.msra.mxu0 %v399
    %474 = vmatprep.subr.mxu0 0.0
    %475 = vmatpush1.msra.mxu0 %v400
    %476 = vmatprep.subr.mxu0 0.0
    %477 = vmatpush1.msra.mxu0 %v416
    %478 = vmatprep.subr.mxu0 0.0
    %479 = vmatpush1.msra.mxu0 %v418
    %480 = vmatprep.subr.mxu0 0.0
    %481 = vmatpush1.msra.mxu0 %v428
    %482 = vmatprep.subr.mxu0 0.0
    %483 = vmatpush1.msra.mxu0 %v430
    %484 = vmatprep.subr.mxu0 0.0
    %485 = vmatpush1.msra.mxu0 0.0
    %486 = vmatprep.subr.mxu0 0.0
    %487 = vmatpush1.msra.mxu0 0.0
    %488 = vmatprep.subr.mxu0 0.0
    %489 = vmatpush1.msra.mxu0 0.0
    %490 = vmatprep.subr.mxu0 0.0
    %491 = vmatpush1.msra.mxu0 0.0
    %492 = vmatprep.subr.mxu0 0.0
    %493 = vmatpush1.msra.mxu0 0.0
    %494 = vmatprep.subr.mxu0 0.0
    %495 = vmatpush1.msra.mxu0 0.0
    %496 = vmatprep.subr.mxu0 0.0
    %497 = vmatpush1.msra.mxu0 0.0
    %498 = vmatprep.subr.mxu0 0.0
    %499 = vmatpush1.msra.mxu0 0.0
    %500 = vmatprep.subr.mxu0 0.0
    %501 = vmatpush1.msra.mxu0 0.0
    %502 = vmatprep.subr.mxu0 0.0
    %503 = vmatpush1.msra.mxu0 0.0
    %504 = vmatprep.subr.mxu0 0.0
    %505 = vmatpush1.msra.mxu0 0.0
    %506 = vmatprep.subr.mxu0 0.0
    %507 = vmatpush1.msra.mxu0 0.0
    %508 = vmatprep.subr.mxu0 0.0
    %509 = vmatpush1.msra.mxu0 0.0
    %510 = vmatprep.subr.mxu0 0.0
    %511 = vmatpush1.msra.mxu0 0.0
    %512 = vmatprep.subr.mxu0 0.0
    %513 = vmatpush1.msra.mxu0 0.0
    %514 = vmatprep.subr.mxu0 0.0
    %515 = vmatpush1.msra.mxu0 0.0
    %516 = vmatprep.subr.mxu0 0.0
    %517 = vmatpush1.msra.mxu0 0.0
    %518 = vmatprep.subr.mxu0 0.0
    %519 = vmatpush1.msra.mxu0 0.0
    %520 = vmatprep.subr.mxu0 0.0
    %521 = vmatpush1.msra.mxu0 0.0
    %522 = vmatprep.subr.mxu0 0.0
    %523 = vmatpush1.msra.mxu0 0.0
    %524 = vmatprep.subr.mxu0 0.0
    %525 = vmatpush1.msra.mxu0 0.0
    %526 = vmatprep.subr.mxu0 0.0
    %527 = vmatpush1.msra.mxu0 0.0
    %528 = vmatprep.subr.mxu0 0.0
    %529 = vmatpush1.msra.mxu0 0.0
    %530 = vmatprep.subr.mxu0 0.0
    %531 = vmatpush1.msra.mxu0 0.0
    %532 = vmatprep.subr.mxu0 0.0
    %533 = vmatpush1.msra.mxu0 0.0
    %534 = vmatprep.subr.mxu0 0.0
    %535 = vmatpush1.msra.mxu0 0.0
    %536 = vmatprep.mubr.f32.mxu0 0.0
    %537 = vmatmul.mubr.f32.gmra.mrb[0].mxu0 %v461
    %v538 = vpop.f32.mrb[0].mxu0
    %v539 = vadd.f32 %v442, %v538
    %v540 = vpop.f32.mrb[0].mxu0
    %541 = vmatprep.mubr.f32.mxu0 0.0
    %542 = vmatmul.mubr.f32.gmra.mrb[0].mxu0 %v464
    %v543 = vpop.f32.mrb[0].mxu0
    %v544 = vadd.f32 %v447, %v543
    %v545 = vpop.f32.mrb[0].mxu0
    %546 = vmatprep.mubr.f32.mxu0 0.0
    %547 = vmatmul.mubr.f32.gmra.mrb[0].mxu0 %v467
    %v548 = vpop.f32.mrb[0].mxu0
    %v549 = vadd.f32 %v452, %v548
    %v550 = vpop.f32.mrb[0].mxu0
    %551 = vmatprep.mubr.f32.mxu0 0.0
    %552 = vmatmul.mubr.f32.gmra.mrb[0].mxu0 %v470
    %v553 = vpop.f32.mrb[0].mxu0
    %v554 = vadd.f32 %v457, %v553
    %v555 = vpop.f32.mrb[0].mxu0
    %556 = vdwg.mxu0
    %557 = vmatprep.subr.mxu0 0.0
    %558 = vmatpush1.msra.mxu0 %v401
    %559 = vmatprep.subr.mxu0 0.0
    %560 = vmatpush1.msra.mxu0 %v402
    %561 = vmatprep.subr.mxu0 0.0
    %562 = vmatpush1.msra.mxu0 %v420
    %563 = vmatprep.subr.mxu0 0.0
    %564 = vmatpush1.msra.mxu0 %v422
    %565 = vmatprep.subr.mxu0 0.0
    %566 = vmatpush1.msra.mxu0 %v432
    %567 = vmatprep.subr.mxu0 0.0
    %568 = vmatpush1.msra.mxu0 %v434
    %569 = vmatprep.subr.mxu0 0.0
    %570 = vmatpush1.msra.mxu0 0.0
    %571 = vmatprep.subr.mxu0 0.0
    %572 = vmatpush1.msra.mxu0 0.0
    %573 = vmatprep.subr.mxu0 0.0
    %574 = vmatpush1.msra.mxu0 0.0
    %575 = vmatprep.subr.mxu0 0.0
    %576 = vmatpush1.msra.mxu0 0.0
    %577 = vmatprep.subr.mxu0 0.0
    %578 = vmatpush1.msra.mxu0 0.0
    %579 = vmatprep.subr.mxu0 0.0
    %580 = vmatpush1.msra.mxu0 0.0
    %581 = vmatprep.subr.mxu0 0.0
    %582 = vmatpush1.msra.mxu0 0.0
    %583 = vmatprep.subr.mxu0 0.0
    %584 = vmatpush1.msra.mxu0 0.0
    %585 = vmatprep.subr.mxu0 0.0
    %586 = vmatpush1.msra.mxu0 0.0
    %587 = vmatprep.subr.mxu0 0.0
    %588 = vmatpush1.msra.mxu0 0.0
    %589 = vmatprep.subr.mxu0 0.0
    %590 = vmatpush1.msra.mxu0 0.0
    %591 = vmatprep.subr.mxu0 0.0
    %592 = vmatpush1.msra.mxu0 0.0
    %593 = vmatprep.subr.mxu0 0.0
    %594 = vmatpush1.msra.mxu0 0.0
    %595 = vmatprep.subr.mxu0 0.0
    %596 = vmatpush1.msra.mxu0 0.0
    %597 = vmatprep.subr.mxu0 0.0
    %598 = vmatpush1.msra.mxu0 0.0
    %599 = vmatprep.subr.mxu0 0.0
    %600 = vmatpush1.msra.mxu0 0.0
    %601 = vmatprep.subr.mxu0 0.0
    %602 = vmatpush1.msra.mxu0 0.0
    %603 = vmatprep.subr.mxu0 0.0
    %604 = vmatpush1.msra.mxu0 0.0
    %605 = vmatprep.subr.mxu0 0.0
    %606 = vmatpush1.msra.mxu0 0.0
    %607 = vmatprep.subr.mxu0 0.0
    %608 = vmatpush1.msra.mxu0 0.0
    %609 = vmatprep.subr.mxu0 0.0
    %610 = vmatpush1.msra.mxu0 0.0
    %611 = vmatprep.subr.mxu0 0.0
    %612 = vmatpush1.msra.mxu0 0.0
    %613 = vmatprep.subr.mxu0 0.0
    %614 = vmatpush1.msra.mxu0 0.0
    %615 = vmatprep.subr.mxu0 0.0
    %616 = vmatpush1.msra.mxu0 0.0
    %617 = vmatprep.subr.mxu0 0.0
    %618 = vmatpush1.msra.mxu0 0.0
    %619 = vmatprep.subr.mxu0 0.0
    %620 = vmatpush1.msra.mxu0 0.0
    %621 = vmatprep.mubr.f32.mxu0 0.0
    %622 = vmatmul.mubr.f32.gmra.mrb[0].mxu0 %v461
    %v623 = vpop.f32.mrb[0].mxu0
    %v624 = vadd.f32 %v442, %v623
    %v625 = vpop.f32.mrb[0].mxu0
    %626 = vmatprep.mubr.f32.mxu0 0.0
    %627 = vmatmul.mubr.f32.gmra.mrb[0].mxu0 %v464
    %v628 = vpop.f32.mrb[0].mxu0
    %v629 = vadd.f32 %v447, %v628
    %v630 = vpop.f32.mrb[0].mxu0
    %631 = vmatprep.mubr.f32.mxu0 0.0
    %632 = vmatmul.mubr.f32.gmra.mrb[0].mxu0 %v467
    %v633 = vpop.f32.mrb[0].mxu0
    %v634 = vadd.f32 %v452, %v633
    %v635 = vpop.f32.mrb[0].mxu0
    %636 = vmatprep.mubr.f32.mxu0 0.0
    %637 = vmatmul.mubr.f32.gmra.mrb[0].mxu0 %v470
    %v638 = vpop.f32.mrb[0].mxu0
    %v639 = vadd.f32 %v457, %v638
    %v640 = vpop.f32.mrb[0].mxu0
    %641 = vdwg.mxu0
    %v642 = vmax.f32 %v539, 0.0
    %v643 = vmax.f32 %v544, 0.0
    %v644 = vmax.f32 %v549, 0.0
    %v645 = vmax.f32 %v554, 0.0
    %v646 = vmax.f32 %v624, 0.0
    %v647 = vmax.f32 %v629, 0.0
    %v648 = vmax.f32 %v634, 0.0
    %v649 = vmax.f32 %v639, 0.0
    %vm650 = vcmask 80896
    %651 = vst.msk [vmem:[%s7] sm:$0xff] %vm650, %v642
    %652 = vst.msk [vmem:[%s7 + $0x8] sm:$0xff] %vm650, %v643
    %653 = vst.msk [vmem:[%s7 + $0x10] sm:$0xff] %vm650, %v644
    %654 = vst.msk [vmem:[%s7 + $0x18] sm:$0xff] %vm650, %v645
    %655 = vst.msk [vmem:[%s7 + $0x20] sm:$0xff] %vm650, %v646
    %656 = vst.msk [vmem:[%s7 + $0x28] sm:$0xff] %vm650, %v647
    %657 = vst.msk [vmem:[%s7 + $0x30] sm:$0xff] %vm650, %v648
    %658 = vst.msk [vmem:[%s7 + $0x38] sm:$0xff] %vm650, %v649
    // Predicated region
    $region34: #{tpu_custom_call.1} parent=1 // pred_check
      _
    $region35: #{tpu_custom_call.1} parent=1 // pred_check_branch
      %660 = sbr.rel (0) target = $region37
    $region36: #{tpu_custom_call.1} parent=1 // pred_region
      _
    $region37: #{tpu_custom_call.1} parent=1 // pred_fallthru
      _
    // Predicated region
    $region38: #{tpu_custom_call.1} parent=1 // pred_check
      _
    $region39: #{tpu_custom_call.1} parent=1 // pred_check_branch
      %662 = sbr.rel (0) target = $region41
    $region40: #{tpu_custom_call.1} parent=1 // pred_region
      _
    $region41: #{tpu_custom_call.1} parent=1 // pred_fallthru
      _
    %663 = vsyncpa [#allocation3], 1

</llo_original>
